<compile_context>
chip_gen: v7x
topology: tpu7x:2x2x1
jax: 0.10.0
libtpu: 0.0.40
codegen_flags: <defaults>
</compile_context>

<pallas_src>
import jax
import jax.numpy as jnp
import numpy as np
from jax.experimental import pallas as pl
from jax.experimental.pallas import tpu as pltpu

# ----------------------------- model dims ----------------------------------
B = 2                 # batch
L = 16                # sequence length
E = 8                 # emb_dim
F1 = 8                # first_num_filters
NF = 8                # num_filters
LF = 16               # last_num_filters
KERNELS = ((1, 3, 5), (1, 3, 5), (1, 3, 5))   # densenet_kernels
DEPTH = len(KERNELS)
WIDTH = len(KERNELS[0])
BL = B * L
MAX_PAD = (max(max(row) for row in KERNELS) - 1) // 2
OFF_ALL = tuple(range(-MAX_PAD, MAX_PAD + 1))        # (-2,-1,0,1,2)
NZ_OFFSETS = tuple(o for o in OFF_ALL if o != 0)     # (-2,-1,1,2)
NNZ = len(NZ_OFFSETS)
LAST_IN = E + NF * WIDTH                             # conv_last in_channels
C_R0 = WIDTH * F1                                    # lanes of fused layer-0 output
C_R01 = C_R0 + WIDTH * NF                            # widest shifted feature (r0|r1)
MW = max(C_R0, WIDTH * NF, LF)                       # widest activation (mask bcast)

# Row tiling of the flattened (B*L) dimension.  Tiles contain whole samples so
# shifts never have to cross a tile boundary.  For real workloads raise
# SAMPLES_PER_TILE until TM >= 512 to amortize per-step pipeline overhead and
# feed both v7x TensorCores via the "parallel" grid axis.
SAMPLES_PER_TILE = B
TM = SAMPLES_PER_TILE * L
assert BL % TM == 0 and TM % 8 == 0

VMEM_SPACE = pltpu.MemorySpace.VMEM


# ----------------------------- Pallas kernel --------------------------------
def densenet_kernel(x_ref, m_ref, vmask_ref, w0_ref, b0_ref, w1_ref, b1_ref,
                    w2_ref, b2_ref, wl_ref, bl_ref, out_ref):
    rows = x_ref.shape[0]
    x = x_ref[...]                                   # (rows, E) f32

    # Hoisted broadcasts (JAX does not CSE broadcast_in_dim): padding mask to
    # the widest activation width, per-offset validity masks to widest feature.
    m_wide = jnp.broadcast_to(m_ref[...], (rows, MW))
    vm = [jnp.broadcast_to(vmask_ref[:, k:k + 1], (rows, C_R01))
          for k in range(NNZ)]

    def shifted_copies(feat):
        """off -> feat shifted by `off` rows inside each sample (zero padded at
        sample boundaries).  pltpu.roll rides the XLU; one VPU mask-mul zeroes
        wrapped / cross-sample rows.  Cached per (feature, offset) & reused."""
        c = feat.shape[1]
        copies = {0: feat}
        for k, off in enumerate(NZ_OFFSETS):
            # rolled[l] = feat[(l + off) % rows]   (jnp.roll semantics)
            rolled = pltpu.roll(feat, (-off) % rows, axis=0)
            copies[off] = rolled * vm[k][:, :c]
        return copies

    def fused_conv(pieces, w_ref, b_ref):
        """One lane-packed im2col block + ONE MXU matmul covering all taps of
        all three parallel conv columns of a dense layer, then mask -> relu
        (torch order).  Weight is pre-stacked/block-structured wrapper-side."""
        im2col = jnp.concatenate(pieces, axis=1)
        y = jnp.dot(im2col, w_ref[...], preferred_element_type=jnp.float32)
        y = y + b_ref[...]
        return jnp.maximum(y * m_wide[:, :w_ref.shape[1]], 0.0)

    x_sh = shifted_copies(x)
    r0 = fused_conv([x_sh[o] for o in OFF_ALL], w0_ref, b0_ref)       # (rows, 3*F1)
    r0_sh = shifted_copies(r0)
    r1 = fused_conv([r0_sh[o] for o in OFF_ALL], w1_ref, b1_ref)      # (rows, 3*NF)
    r1_sh = shifted_copies(r1)
    r2 = fused_conv([p for o in OFF_ALL for p in (r0_sh[o], r1_sh[o])],
                    w2_ref, b2_ref)                                   # (rows, 3*NF)

    # conv_last: 1x1 conv over cat([x] + merges); no shifts needed.
    y_in = jnp.concatenate([x, r2], axis=1)                           # (rows, LAST_IN)
    y = jnp.dot(y_in, wl_ref[...], preferred_element_type=jnp.float32) + bl_ref[...]
    out_ref[...] = jnp.maximum(y * m_wide[:, :LF], 0.0)


# ----------------------------- wrapper ---------------------------------------
@jax.jit
def densenet_forward(x, mask, packed):
    """x: (B, L, E) float; mask: (B, L) {0,1}.  Returns (B, L, LF)."""
    x_flat = x.reshape(BL, E).astype(jnp.float32)
    m_flat = mask.reshape(BL, 1).astype(jnp.float32)

    def row_tiled(ncols):
        return pl.BlockSpec((TM, ncols), lambda i: (i, 0), memory_space=VMEM_SPACE)

    def replicated(shape):
        return pl.BlockSpec(tuple(shape), lambda i: (0,) * len(shape),
                            memory_space=VMEM_SPACE)

    args = (x_flat, m_flat, packed["vmasks"],
            packed["w0"], packed["b0"], packed["w1"], packed["b1"],
            packed["w2"], packed["b2"], packed["wl"], packed["bl"])

    in_specs = [row_tiled(E), row_tiled(1)] + [replicated(a.shape) for a in args[2:]]

    out = pl.pallas_call(
        densenet_kernel,
        grid=(BL // TM,),
        in_specs=in_specs,
        out_specs=pl.BlockSpec((TM, LF), lambda i: (i, 0), memory_space=VMEM_SPACE),
        out_shape=jax.ShapeDtypeStruct((BL, LF), jnp.float32),
        compiler_params=pltpu.CompilerParams(dimension_semantics=("parallel",)),
    )(*args)
    return out.reshape(B, L, LF)


# ----------------------------- weight packing --------------------------------
def pack_params(params):
    """Repack per-conv weights into one block-structured (n_off*C_in, 3*C_out)
    matrix per dense layer, matching the kernel's lane-packed im2col layout
    (offset-major, source-lane-minor).  Also builds the per-offset boundary
    validity masks with numpy."""

    def pack_layer(src_width, lane_maps, out_w, layer_params):
        w_big = np.zeros((len(OFF_ALL) * src_width, WIDTH * out_w), np.float32)
        b_big = np.zeros((1, WIDTH * out_w), np.float32)
        for j, (w, b) in enumerate(layer_params):
            w = np.asarray(w)          # (ks, cin, cout)
            b = np.asarray(b)          # (1, cout)
            ks = w.shape[0]
            pad = (ks - 1) // 2
            for t in range(ks):
                oi = OFF_ALL.index(t - pad)
                for ci, lane in enumerate(lane_maps[j]):
                    w_big[oi * src_width + lane, j * out_w:(j + 1) * out_w] = w[t, ci]
            b_big[0, j * out_w:(j + 1) * out_w] = b[0]
        return w_big, b_big

    # Which lanes of the kernel's fused source feature feed conv column j.
    lm0 = [list(range(E)) for _ in range(WIDTH)]                          # all read x
    lm1 = [list(range(j * F1, (j + 1) * F1)) for j in range(WIDTH)]       # r0_j
    lm2 = [list(range(j * F1, (j + 1) * F1)) +                            # cat(r0_j,
           list(range(C_R0 + j * NF, C_R0 + (j + 1) * NF))                #     r1_j)
           for j in range(WIDTH)]

    w0, b0 = pack_layer(E, lm0, F1, params["blocks"][0])
    w1, b1 = pack_layer(C_R0, lm1, NF, params["blocks"][1])
    w2, b2 = pack_layer(C_R01, lm2, NF, params["blocks"][2])

    ris = np.arange(TM) % L
    vmasks = np.stack([((ris + off >= 0) & (ris + off < L)).astype(np.float32)
                       for off in NZ_OFFSETS], axis=1)                    # (TM, NNZ)

    f = lambda a: jnp.asarray(a, jnp.float32)
    return {"vmasks": f(vmasks),
            "w0": f(w0), "b0": f(b0), "w1": f(w1), "b1": f(b1),
            "w2": f(w2), "b2": f(b2),
            "wl": f(params["w_last"]), "bl": f(params["b_last"])}


# ----------------------------- pure-JAX reference ----------------------------
def _conv1d_ref(x, w, b, ks):
    # x: (B, L, Cin), w: (ks, Cin, Cout), b: (1, Cout)
    pad = (ks - 1) // 2
    xp = jnp.pad(x, ((0, 0), (pad, pad), (0, 0)))
    acc = jnp.zeros(x.shape[:2] + (w.shape[-1],), jnp.float32) + b[0]
    for t in range(ks):
        acc = acc + jnp.einsum("blc,cf->blf", xp[:, t:t + x.shape[1], :], w[t],
                               precision=jax.lax.Precision.HIGHEST)
    return acc


def reference_forward(x, mask, params):
    m = mask.astype(jnp.float32)[:, :, None]
    merges = []
    for j in range(WIDTH):
        results = []
        for i in range(DEPTH):
            conv_in = x if i == 0 else jnp.concatenate(results, axis=-1)
            w, b = params["blocks"][i][j]
            o = _conv1d_ref(conv_in, w, b, KERNELS[i][j])
            o = jnp.maximum(o * m, 0.0)
            results.append(o)
        merges.append(results[-1])
    last_in = jnp.concatenate([x] + merges, axis=-1)
    y = jnp.einsum("blc,cf->blf", last_in, params["w_last"],
                   precision=jax.lax.Precision.HIGHEST) + params["b_last"][0]
    return jnp.maximum(y * m, 0.0)


# ----------------------------- param init ------------------------------------
def init_params(key):
    keys = jax.random.split(key, DEPTH * WIDTH + 1)
    blocks, kidx = [], 0
    for i in range(DEPTH):
        row_params = []
        for j in range(WIDTH):
            ks = KERNELS[i][j]
            cin = E if i == 0 else F1 + NF * (i - 1)
            cout = F1 if i == 0 else NF
            k1, k2 = jax.random.split(keys[kidx]); kidx += 1
            w = 0.1 * jax.random.normal(k1, (ks, cin, cout), jnp.float32)
            b = 0.1 * jax.random.normal(k2, (1, cout), jnp.float32)
            row_params.append((w, b))
        blocks.append(row_params)
    k1, k2 = jax.random.split(keys[-1])
    return {"blocks": blocks,
            "w_last": 0.1 * jax.random.normal(k1, (LAST_IN, LF), jnp.float32),
            "b_last": 0.1 * jax.random.normal(k2, (1, LF), jnp.float32)}


# ----------------------------- main ------------------------------------------
if __name__ == "__main__":
    key = jax.random.PRNGKey(0)
    kp, kx = jax.random.split(key)
    params = init_params(kp)
    packed = pack_params(params)

    x = jax.random.normal(kx, (B, L, E), jnp.float32)
    # sample 0 fully valid, sample 1 has 4 padded positions
    mask = jnp.array([[1] * L, [1] * (L - 4) + [0] * 4], dtype=jnp.int32)

    out = densenet_forward(x, mask, packed)
    out = jax.block_until_ready(out)

    ref = reference_forward(x, mask, params)
    # Tolerance explicitly accepts MXU bf16-operand-level error vs. the
    # Precision.HIGHEST reference (see review); structural bugs (wrong shift
    # direction / weight block mapping) would produce O(0.1-1) errors.
    np.testing.assert_allclose(np.asarray(out), np.asarray(ref),
                               rtol=1e-2, atol=1e-2)
    assert out.shape == (B, L, LF)
    print("KERNEL_OK")
</pallas_src>

<mosaic_0001>
module attributes {stable_mosaic.version = 11 : i64} {
  func.func @densenet_kernel(%arg0: i32, %arg1: memref<32x8xf32, #tpu.memory_space<vmem>>, %arg2: memref<32x1xf32, #tpu.memory_space<vmem>>, %arg3: memref<32x4xf32, #tpu.memory_space<vmem>>, %arg4: memref<40x24xf32, #tpu.memory_space<vmem>>, %arg5: memref<1x24xf32, #tpu.memory_space<vmem>>, %arg6: memref<120x24xf32, #tpu.memory_space<vmem>>, %arg7: memref<1x24xf32, #tpu.memory_space<vmem>>, %arg8: memref<240x24xf32, #tpu.memory_space<vmem>>, %arg9: memref<1x24xf32, #tpu.memory_space<vmem>>, %arg10: memref<32x16xf32, #tpu.memory_space<vmem>>, %arg11: memref<1x16xf32, #tpu.memory_space<vmem>>, %arg12: memref<32x16xf32, #tpu.memory_space<vmem>>) attributes {dimension_semantics = [#tpu.dimension_semantics<parallel>], iteration_bounds = array<i64: 1>, scalar_prefetch = 0 : i64, scratch_operands = 0 : i64, tpu.core_type = #tpu.core_type<tc>, window_params = [{transform_indices = @transform_0, window_bounds = array<i64: 32, 8>}, {transform_indices = @transform_1, window_bounds = array<i64: 32, 1>}, {pipeline_mode = #tpu.pipeline_mode<synchronous>, transform_indices = @transform_2, window_bounds = array<i64: 32, 4>}, {pipeline_mode = #tpu.pipeline_mode<synchronous>, transform_indices = @transform_3, window_bounds = array<i64: 40, 24>}, {pipeline_mode = #tpu.pipeline_mode<synchronous>, transform_indices = @transform_4, window_bounds = array<i64: 1, 24>}, {pipeline_mode = #tpu.pipeline_mode<synchronous>, transform_indices = @transform_5, window_bounds = array<i64: 120, 24>}, {pipeline_mode = #tpu.pipeline_mode<synchronous>, transform_indices = @transform_6, window_bounds = array<i64: 1, 24>}, {pipeline_mode = #tpu.pipeline_mode<synchronous>, transform_indices = @transform_7, window_bounds = array<i64: 240, 24>}, {pipeline_mode = #tpu.pipeline_mode<synchronous>, transform_indices = @transform_8, window_bounds = array<i64: 1, 24>}, {pipeline_mode = #tpu.pipeline_mode<synchronous>, transform_indices = @transform_9, window_bounds = array<i64: 32, 16>}, {pipeline_mode = #tpu.pipeline_mode<synchronous>, transform_indices = @transform_10, window_bounds = array<i64: 1, 16>}, {transform_indices = @transform_11, window_bounds = array<i64: 32, 16>}]} {
    %c0 = arith.constant 0 : index
    %c0_0 = arith.constant 0 : index
    %0 = vector.load %arg1[%c0, %c0_0] : memref<32x8xf32, #tpu.memory_space<vmem>>, vector<32x8xf32>
    %c0_1 = arith.constant 0 : index
    %c0_2 = arith.constant 0 : index
    %1 = vector.load %arg2[%c0_1, %c0_2] : memref<32x1xf32, #tpu.memory_space<vmem>>, vector<32x1xf32>
    %2 = vector.shape_cast %1 : vector<32x1xf32> to vector<32x1xf32>
    %3 = vector.broadcast %2 : vector<32x1xf32> to vector<32x24xf32>
    %c0_3 = arith.constant 0 : index
    %c0_4 = arith.constant 0 : index
    %4 = vector.load %arg3[%c0_3, %c0_4] : memref<32x4xf32, #tpu.memory_space<vmem>>, vector<32x1xf32>
    %5 = vector.shape_cast %4 : vector<32x1xf32> to vector<32x1xf32>
    %6 = vector.broadcast %5 : vector<32x1xf32> to vector<32x48xf32>
    %c0_5 = arith.constant 0 : index
    %c1 = arith.constant 1 : index
    %7 = vector.load %arg3[%c0_5, %c1] : memref<32x4xf32, #tpu.memory_space<vmem>>, vector<32x1xf32>
    %8 = vector.shape_cast %7 : vector<32x1xf32> to vector<32x1xf32>
    %9 = vector.broadcast %8 : vector<32x1xf32> to vector<32x48xf32>
    %c0_6 = arith.constant 0 : index
    %c2 = arith.constant 2 : index
    %10 = vector.load %arg3[%c0_6, %c2] : memref<32x4xf32, #tpu.memory_space<vmem>>, vector<32x1xf32>
    %11 = vector.shape_cast %10 : vector<32x1xf32> to vector<32x1xf32>
    %12 = vector.broadcast %11 : vector<32x1xf32> to vector<32x48xf32>
    %c0_7 = arith.constant 0 : index
    %c3 = arith.constant 3 : index
    %13 = vector.load %arg3[%c0_7, %c3] : memref<32x4xf32, #tpu.memory_space<vmem>>, vector<32x1xf32>
    %14 = vector.shape_cast %13 : vector<32x1xf32> to vector<32x1xf32>
    %15 = vector.broadcast %14 : vector<32x1xf32> to vector<32x48xf32>
    %c2_i32 = arith.constant 2 : i32
    %16 = tpu.dynamic_rotate %0 by %c2_i32 dim 0 : vector<32x8xf32>, i32 -> vector<32x8xf32>
    %17 = vector.extract_strided_slice %6 {offsets = [0, 0], sizes = [32, 8], strides = [1, 1]} : vector<32x48xf32> to vector<32x8xf32>
    %18 = arith.mulf %16, %17 : vector<32x8xf32>
    %c1_i32 = arith.constant 1 : i32
    %19 = tpu.dynamic_rotate %0 by %c1_i32 dim 0 : vector<32x8xf32>, i32 -> vector<32x8xf32>
    %20 = vector.extract_strided_slice %9 {offsets = [0, 0], sizes = [32, 8], strides = [1, 1]} : vector<32x48xf32> to vector<32x8xf32>
    %21 = arith.mulf %19, %20 : vector<32x8xf32>
    %c31_i32 = arith.constant 31 : i32
    %22 = tpu.dynamic_rotate %0 by %c31_i32 dim 0 : vector<32x8xf32>, i32 -> vector<32x8xf32>
    %23 = vector.extract_strided_slice %12 {offsets = [0, 0], sizes = [32, 8], strides = [1, 1]} : vector<32x48xf32> to vector<32x8xf32>
    %24 = arith.mulf %22, %23 : vector<32x8xf32>
    %c30_i32 = arith.constant 30 : i32
    %25 = tpu.dynamic_rotate %0 by %c30_i32 dim 0 : vector<32x8xf32>, i32 -> vector<32x8xf32>
    %26 = vector.extract_strided_slice %15 {offsets = [0, 0], sizes = [32, 8], strides = [1, 1]} : vector<32x48xf32> to vector<32x8xf32>
    %27 = arith.mulf %25, %26 : vector<32x8xf32>
    %28 = tpu.concatenate %18, %21, %0, %24, %27 in 1 : vector<32x8xf32>, vector<32x8xf32>, vector<32x8xf32>, vector<32x8xf32>, vector<32x8xf32> -> vector<32x40xf32>
    %c0_8 = arith.constant 0 : index
    %c0_9 = arith.constant 0 : index
    %29 = vector.load %arg4[%c0_8, %c0_9] : memref<40x24xf32, #tpu.memory_space<vmem>>, vector<40x24xf32>
    %cst = arith.constant dense<0.000000e+00> : vector<32x24xf32>
    %30 = tpu.matmul %28, %29, %cst {dimension_numbers = #tpu.dot_dimension_numbers<[1], [0], [0], [1], [0, 0, 1, 1], [], []>} : vector<32x40xf32>, vector<40x24xf32>, vector<32x24xf32> -> vector<32x24xf32>
    %c0_10 = arith.constant 0 : index
    %c0_11 = arith.constant 0 : index
    %31 = vector.load %arg5[%c0_10, %c0_11] : memref<1x24xf32, #tpu.memory_space<vmem>>, vector<1x24xf32>
    %32 = vector.broadcast %31 : vector<1x24xf32> to vector<32x24xf32>
    %33 = arith.addf %30, %32 : vector<32x24xf32>
    %34 = arith.mulf %33, %3 : vector<32x24xf32>
    %cst_12 = arith.constant 0.000000e+00 : f32
    %35 = vector.broadcast %cst_12 : f32 to vector<32x24xf32>
    %36 = arith.maximumf %34, %35 : vector<32x24xf32>
    %c2_i32_13 = arith.constant 2 : i32
    %37 = tpu.dynamic_rotate %36 by %c2_i32_13 dim 0 : vector<32x24xf32>, i32 -> vector<32x24xf32>
    %38 = vector.extract_strided_slice %6 {offsets = [0, 0], sizes = [32, 24], strides = [1, 1]} : vector<32x48xf32> to vector<32x24xf32>
    %39 = arith.mulf %37, %38 : vector<32x24xf32>
    %c1_i32_14 = arith.constant 1 : i32
    %40 = tpu.dynamic_rotate %36 by %c1_i32_14 dim 0 : vector<32x24xf32>, i32 -> vector<32x24xf32>
    %41 = vector.extract_strided_slice %9 {offsets = [0, 0], sizes = [32, 24], strides = [1, 1]} : vector<32x48xf32> to vector<32x24xf32>
    %42 = arith.mulf %40, %41 : vector<32x24xf32>
    %c31_i32_15 = arith.constant 31 : i32
    %43 = tpu.dynamic_rotate %36 by %c31_i32_15 dim 0 : vector<32x24xf32>, i32 -> vector<32x24xf32>
    %44 = vector.extract_strided_slice %12 {offsets = [0, 0], sizes = [32, 24], strides = [1, 1]} : vector<32x48xf32> to vector<32x24xf32>
    %45 = arith.mulf %43, %44 : vector<32x24xf32>
    %c30_i32_16 = arith.constant 30 : i32
    %46 = tpu.dynamic_rotate %36 by %c30_i32_16 dim 0 : vector<32x24xf32>, i32 -> vector<32x24xf32>
    %47 = vector.extract_strided_slice %15 {offsets = [0, 0], sizes = [32, 24], strides = [1, 1]} : vector<32x48xf32> to vector<32x24xf32>
    %48 = arith.mulf %46, %47 : vector<32x24xf32>
    %49 = tpu.concatenate %39, %42, %36, %45, %48 in 1 : vector<32x24xf32>, vector<32x24xf32>, vector<32x24xf32>, vector<32x24xf32>, vector<32x24xf32> -> vector<32x120xf32>
    %c0_17 = arith.constant 0 : index
    %c0_18 = arith.constant 0 : index
    %50 = vector.load %arg6[%c0_17, %c0_18] : memref<120x24xf32, #tpu.memory_space<vmem>>, vector<120x24xf32>
    %cst_19 = arith.constant dense<0.000000e+00> : vector<32x24xf32>
    %51 = tpu.matmul %49, %50, %cst_19 {dimension_numbers = #tpu.dot_dimension_numbers<[1], [0], [0], [1], [0, 0, 1, 1], [], []>} : vector<32x120xf32>, vector<120x24xf32>, vector<32x24xf32> -> vector<32x24xf32>
    %c0_20 = arith.constant 0 : index
    %c0_21 = arith.constant 0 : index
    %52 = vector.load %arg7[%c0_20, %c0_21] : memref<1x24xf32, #tpu.memory_space<vmem>>, vector<1x24xf32>
    %53 = vector.broadcast %52 : vector<1x24xf32> to vector<32x24xf32>
    %54 = arith.addf %51, %53 : vector<32x24xf32>
    %55 = arith.mulf %54, %3 : vector<32x24xf32>
    %cst_22 = arith.constant 0.000000e+00 : f32
    %56 = vector.broadcast %cst_22 : f32 to vector<32x24xf32>
    %57 = arith.maximumf %55, %56 : vector<32x24xf32>
    %c2_i32_23 = arith.constant 2 : i32
    %58 = tpu.dynamic_rotate %57 by %c2_i32_23 dim 0 : vector<32x24xf32>, i32 -> vector<32x24xf32>
    %59 = vector.extract_strided_slice %6 {offsets = [0, 0], sizes = [32, 24], strides = [1, 1]} : vector<32x48xf32> to vector<32x24xf32>
    %60 = arith.mulf %58, %59 : vector<32x24xf32>
    %c1_i32_24 = arith.constant 1 : i32
    %61 = tpu.dynamic_rotate %57 by %c1_i32_24 dim 0 : vector<32x24xf32>, i32 -> vector<32x24xf32>
    %62 = vector.extract_strided_slice %9 {offsets = [0, 0], sizes = [32, 24], strides = [1, 1]} : vector<32x48xf32> to vector<32x24xf32>
    %63 = arith.mulf %61, %62 : vector<32x24xf32>
    %c31_i32_25 = arith.constant 31 : i32
    %64 = tpu.dynamic_rotate %57 by %c31_i32_25 dim 0 : vector<32x24xf32>, i32 -> vector<32x24xf32>
    %65 = vector.extract_strided_slice %12 {offsets = [0, 0], sizes = [32, 24], strides = [1, 1]} : vector<32x48xf32> to vector<32x24xf32>
    %66 = arith.mulf %64, %65 : vector<32x24xf32>
    %c30_i32_26 = arith.constant 30 : i32
    %67 = tpu.dynamic_rotate %57 by %c30_i32_26 dim 0 : vector<32x24xf32>, i32 -> vector<32x24xf32>
    %68 = vector.extract_strided_slice %15 {offsets = [0, 0], sizes = [32, 24], strides = [1, 1]} : vector<32x48xf32> to vector<32x24xf32>
    %69 = arith.mulf %67, %68 : vector<32x24xf32>
    %70 = tpu.concatenate %39, %60, %42, %63, %36, %57, %45, %66, %48, %69 in 1 : vector<32x24xf32>, vector<32x24xf32>, vector<32x24xf32>, vector<32x24xf32>, vector<32x24xf32>, vector<32x24xf32>, vector<32x24xf32>, vector<32x24xf32>, vector<32x24xf32>, vector<32x24xf32> -> vector<32x240xf32>
    %c0_27 = arith.constant 0 : index
    %c0_28 = arith.constant 0 : index
    %71 = vector.load %arg8[%c0_27, %c0_28] : memref<240x24xf32, #tpu.memory_space<vmem>>, vector<240x24xf32>
    %cst_29 = arith.constant dense<0.000000e+00> : vector<32x24xf32>
    %72 = tpu.matmul %70, %71, %cst_29 {dimension_numbers = #tpu.dot_dimension_numbers<[1], [0], [0], [1], [0, 0, 1, 1], [], []>} : vector<32x240xf32>, vector<240x24xf32>, vector<32x24xf32> -> vector<32x24xf32>
    %c0_30 = arith.constant 0 : index
    %c0_31 = arith.constant 0 : index
    %73 = vector.load %arg9[%c0_30, %c0_31] : memref<1x24xf32, #tpu.memory_space<vmem>>, vector<1x24xf32>
    %74 = vector.broadcast %73 : vector<1x24xf32> to vector<32x24xf32>
    %75 = arith.addf %72, %74 : vector<32x24xf32>
    %76 = arith.mulf %75, %3 : vector<32x24xf32>
    %cst_32 = arith.constant 0.000000e+00 : f32
    %77 = vector.broadcast %cst_32 : f32 to vector<32x24xf32>
    %78 = arith.maximumf %76, %77 : vector<32x24xf32>
    %79 = tpu.concatenate %0, %78 in 1 : vector<32x8xf32>, vector<32x24xf32> -> vector<32x32xf32>
    %c0_33 = arith.constant 0 : index
    %c0_34 = arith.constant 0 : index
    %80 = vector.load %arg10[%c0_33, %c0_34] : memref<32x16xf32, #tpu.memory_space<vmem>>, vector<32x16xf32>
    %cst_35 = arith.constant dense<0.000000e+00> : vector<32x16xf32>
    %81 = tpu.matmul %79, %80, %cst_35 {dimension_numbers = #tpu.dot_dimension_numbers<[1], [0], [0], [1], [0, 0, 1, 1], [], []>} : vector<32x32xf32>, vector<32x16xf32>, vector<32x16xf32> -> vector<32x16xf32>
    %c0_36 = arith.constant 0 : index
    %c0_37 = arith.constant 0 : index
    %82 = vector.load %arg11[%c0_36, %c0_37] : memref<1x16xf32, #tpu.memory_space<vmem>>, vector<1x16xf32>
    %83 = vector.broadcast %82 : vector<1x16xf32> to vector<32x16xf32>
    %84 = arith.addf %81, %83 : vector<32x16xf32>
    %85 = vector.extract_strided_slice %3 {offsets = [0, 0], sizes = [32, 16], strides = [1, 1]} : vector<32x24xf32> to vector<32x16xf32>
    %86 = arith.mulf %84, %85 : vector<32x16xf32>
    %cst_38 = arith.constant 0.000000e+00 : f32
    %87 = vector.broadcast %cst_38 : f32 to vector<32x16xf32>
    %88 = arith.maximumf %86, %87 : vector<32x16xf32>
    %c0_39 = arith.constant 0 : index
    %c0_40 = arith.constant 0 : index
    %89 = vector.load %arg12[%c0_39, %c0_40] : memref<32x16xf32, #tpu.memory_space<vmem>>, vector<32x16xf32>
    tpu.vector_store %arg12[%c0_39, %c0_40], %88 {strides = array<i32>} : memref<32x16xf32, #tpu.memory_space<vmem>>, vector<32x16xf32>,
    return
  }
  func.func @transform_0(%arg0: i32) -> (i32, i32) {
    %c0_i32 = arith.constant 0 : i32
    %c0_i32_0 = arith.constant 0 : i32
    return %arg0, %c0_i32 : i32, i32
  }
  func.func @transform_1(%arg0: i32) -> (i32, i32) {
    %c0_i32 = arith.constant 0 : i32
    %c0_i32_0 = arith.constant 0 : i32
    return %arg0, %c0_i32 : i32, i32
  }
  func.func @transform_2(%arg0: i32) -> (i32, i32) {
    %c0_i32 = arith.constant 0 : i32
    %c0_i32_0 = arith.constant 0 : i32
    %c0_i32_1 = arith.constant 0 : i32
    return %c0_i32, %c0_i32_0 : i32, i32
  }
  func.func @transform_3(%arg0: i32) -> (i32, i32) {
    %c0_i32 = arith.constant 0 : i32
    %c0_i32_0 = arith.constant 0 : i32
    %c0_i32_1 = arith.constant 0 : i32
    return %c0_i32, %c0_i32_0 : i32, i32
  }
  func.func @transform_4(%arg0: i32) -> (i32, i32) {
    %c0_i32 = arith.constant 0 : i32
    %c0_i32_0 = arith.constant 0 : i32
    %c0_i32_1 = arith.constant 0 : i32
    return %c0_i32, %c0_i32_0 : i32, i32
  }
  func.func @transform_5(%arg0: i32) -> (i32, i32) {
    %c0_i32 = arith.constant 0 : i32
    %c0_i32_0 = arith.constant 0 : i32
    %c0_i32_1 = arith.constant 0 : i32
    return %c0_i32, %c0_i32_0 : i32, i32
  }
  func.func @transform_6(%arg0: i32) -> (i32, i32) {
    %c0_i32 = arith.constant 0 : i32
    %c0_i32_0 = arith.constant 0 : i32
    %c0_i32_1 = arith.constant 0 : i32
    return %c0_i32, %c0_i32_0 : i32, i32
  }
  func.func @transform_7(%arg0: i32) -> (i32, i32) {
    %c0_i32 = arith.constant 0 : i32
    %c0_i32_0 = arith.constant 0 : i32
    %c0_i32_1 = arith.constant 0 : i32
    return %c0_i32, %c0_i32_0 : i32, i32
  }
  func.func @transform_8(%arg0: i32) -> (i32, i32) {
    %c0_i32 = arith.constant 0 : i32
    %c0_i32_0 = arith.constant 0 : i32
    %c0_i32_1 = arith.constant 0 : i32
    return %c0_i32, %c0_i32_0 : i32, i32
  }
  func.func @transform_9(%arg0: i32) -> (i32, i32) {
    %c0_i32 = arith.constant 0 : i32
    %c0_i32_0 = arith.constant 0 : i32
    %c0_i32_1 = arith.constant 0 : i32
    return %c0_i32, %c0_i32_0 : i32, i32
  }
  func.func @transform_10(%arg0: i32) -> (i32, i32) {
    %c0_i32 = arith.constant 0 : i32
    %c0_i32_0 = arith.constant 0 : i32
    %c0_i32_1 = arith.constant 0 : i32
    return %c0_i32, %c0_i32_0 : i32, i32
  }
  func.func @transform_11(%arg0: i32) -> (i32, i32) {
    %c0_i32 = arith.constant 0 : i32
    %c0_i32_0 = arith.constant 0 : i32
    return %arg0, %c0_i32 : i32, i32
  }
}

</mosaic_0001>

<llo_original>
// kernel: densenet_forward.1
$region0: #{densenet_forward.1}
  #allocation0 [shape = 'u32[]', space=smem, size = 0x4, offset = 0x4, fixed_abs, tag = 'smem constant byte address 0x4 - core index']
  #allocation1 [shape = 'u32[144,128]{1,0:T(1,128)}', space=vmem, size = 0x12000, scoped, tag = 'internal scratch']
  %s0 = inlined_call_operand.vmem [shape: f32[32,8], index: 0, kind: input, shape index: {}]
  %s1 = inlined_call_operand.vmem [shape: f32[32,1], index: 1, kind: input, shape index: {}]
  %s2 = inlined_call_operand.vmem [shape: f32[32,4], index: 2, kind: input, shape index: {}]
  %s3 = inlined_call_operand.vmem [shape: f32[40,24], index: 3, kind: input, shape index: {}]
  %s4 = inlined_call_operand.vmem [shape: f32[1,24], index: 4, kind: input, shape index: {}]
  %s5 = inlined_call_operand.vmem [shape: f32[120,24], index: 5, kind: input, shape index: {}]
  %s6 = inlined_call_operand.vmem [shape: f32[1,24], index: 6, kind: input, shape index: {}]
  %s7 = inlined_call_operand.vmem [shape: f32[240,24], index: 7, kind: input, shape index: {}]
  %s8 = inlined_call_operand.vmem [shape: f32[1,24], index: 8, kind: input, shape index: {}]
  %s9 = inlined_call_operand.vmem [shape: f32[32,16], index: 9, kind: input, shape index: {}]
  %s10 = inlined_call_operand.vmem [shape: f32[1,16], index: 10, kind: input, shape index: {}]
  %s11 = inlined_call_operand.hbm [shape: f32[32,16], index: 11, kind: output, shape index: {}]
  %s12 = sld [smem:[#allocation0]]
  $region54: #{densenet_forward.1} parent=0
    _
  %s14 = ssub.s32 1, %s12
  %s15 = scalar_select 0, %s14, %s12
  $region1: #{densenet_forward.1} parent=0
    #allocation2 [shape = 'u8[16384]{0}', space=vmem, size = 0x4000, scoped, tag = 'output window, operand 0, single buffered']
    #allocation3 [shape = 's32[1]{0}', space=sflag, size = 0x4, scoped, tag = 'scoped memory for densenet_forward.1']
    %16 = vsyncpa [#allocation3], 0
    // Predicated region
    $region2: #{densenet_forward.1} parent=1 // pred_check
      _
    $region3: #{densenet_forward.1} parent=1 // pred_check_branch
      %18 = sbr.rel (0) target = $region5
    $region4: #{densenet_forward.1} parent=1 // pred_region
      _
    $region5: #{densenet_forward.1} parent=1 // pred_fallthru
      _
    // Predicated region
    $region6: #{densenet_forward.1} parent=1 // pred_check
      _
    $region7: #{densenet_forward.1} parent=1 // pred_check_branch
      %20 = sbr.rel (0) target = $region9
    $region8: #{densenet_forward.1} parent=1 // pred_region
      _
    $region9: #{densenet_forward.1} parent=1 // pred_fallthru
      _
    // Predicated region
    $region10: #{densenet_forward.1} parent=1 // pred_check
      _
    $region11: #{densenet_forward.1} parent=1 // pred_check_branch
      %22 = sbr.rel (0) target = $region13
    $region12: #{densenet_forward.1} parent=1 // pred_region
      _
    $region13: #{densenet_forward.1} parent=1 // pred_fallthru
      _
    // Predicated region
    $region14: #{densenet_forward.1} parent=1 // pred_check
      _
    $region15: #{densenet_forward.1} parent=1 // pred_check_branch
      %24 = sbr.rel (0) target = $region17
    $region16: #{densenet_forward.1} parent=1 // pred_region
      _
    $region17: #{densenet_forward.1} parent=1 // pred_fallthru
      _
    // Predicated region
    $region18: #{densenet_forward.1} parent=1 // pred_check
      _
    $region19: #{densenet_forward.1} parent=1 // pred_check_branch
      %26 = sbr.rel (0) target = $region21
    $region20: #{densenet_forward.1} parent=1 // pred_region
      _
    $region21: #{densenet_forward.1} parent=1 // pred_fallthru
      _
    // Predicated region
    $region22: #{densenet_forward.1} parent=1 // pred_check
      _
    $region23: #{densenet_forward.1} parent=1 // pred_check_branch
      %28 = sbr.rel (0) target = $region25
    $region24: #{densenet_forward.1} parent=1 // pred_region
      _
    $region25: #{densenet_forward.1} parent=1 // pred_fallthru
      _
    // Predicated region
    $region26: #{densenet_forward.1} parent=1 // pred_check
      _
    $region27: #{densenet_forward.1} parent=1 // pred_check_branch
      %30 = sbr.rel (0) target = $region29
    $region28: #{densenet_forward.1} parent=1 // pred_region
      _
    $region29: #{densenet_forward.1} parent=1 // pred_fallthru
      _
    // Predicated region
    $region30: #{densenet_forward.1} parent=1 // pred_check
      _
    $region31: #{densenet_forward.1} parent=1 // pred_check_branch
      %32 = sbr.rel (0) target = $region33
    $region32: #{densenet_forward.1} parent=1 // pred_region
      _
    $region33: #{densenet_forward.1} parent=1 // pred_fallthru
      _
    // Predicated region
    $region34: #{densenet_forward.1} parent=1 // pred_check
      _
    $region35: #{densenet_forward.1} parent=1 // pred_check_branch
      %34 = sbr.rel (0) target = $region37
    $region36: #{densenet_forward.1} parent=1 // pred_region
      _
    $region37: #{densenet_forward.1} parent=1 // pred_fallthru
      _
    // Predicated region
    $region38: #{densenet_forward.1} parent=1 // pred_check
      _
    $region39: #{densenet_forward.1} parent=1 // pred_check_branch
      %36 = sbr.rel (0) target = $region41
    $region40: #{densenet_forward.1} parent=1 // pred_region
      _
    $region41: #{densenet_forward.1} parent=1 // pred_fallthru
      _
    // Predicated region
    $region42: #{densenet_forward.1} parent=1 // pred_check
      _
    $region43: #{densenet_forward.1} parent=1 // pred_check_branch
      %38 = sbr.rel (0) target = $region45
    $region44: #{densenet_forward.1} parent=1 // pred_region
      _
    $region45: #{densenet_forward.1} parent=1 // pred_fallthru
      _
    %v39 = vld [vmem:[%s0] sm:$0xff]
    %v40 = vld [vmem:[%s0 + $0x8] sm:$0xff]
    %v41 = vld [vmem:[%s0 + $0x10] sm:$0xff]
    %v42 = vld [vmem:[%s0 + $0x18] sm:$0xff]
    %v43 = vld [vmem:[%s1] sm:$0xff]
    %v44 = vld [vmem:[%s1 + $0x8] sm:$0xff]
    %v45 = vld [vmem:[%s1 + $0x10] sm:$0xff]
    %v46 = vld [vmem:[%s1 + $0x18] sm:$0xff]
    %48 = vset.pattern.permute.xlu0 0
    %49 = vperm.xlu0 %48, %v43
    %v50 = vpop.permute.xlu0 %49
    %53 = vset.pattern.permute.xlu0 0
    %54 = vperm.xlu0 %53, %v44
    %v55 = vpop.permute.xlu0 %54
    %58 = vset.pattern.permute.xlu0 0
    %59 = vperm.xlu0 %58, %v45
    %v60 = vpop.permute.xlu0 %59
    %63 = vset.pattern.permute.xlu0 0
    %64 = vperm.xlu0 %63, %v46
    %v65 = vpop.permute.xlu0 %64
    %v67 = vld [vmem:[%s2] sm:$0xff]
    %v68 = vld [vmem:[%s2 + $0x8] sm:$0xff]
    %v69 = vld [vmem:[%s2 + $0x10] sm:$0xff]
    %v70 = vld [vmem:[%s2 + $0x18] sm:$0xff]
    %v71 = vrot.slane %v39, 6
    %v72 = vrot.slane %v40, 6
    %v73 = vrot.slane %v41, 6
    %v74 = vrot.slane %v42, 6
    %v75 = vlaneseq
    %v76 = vshrl.u32 %v75, 7
    %vm77 = vcmp.lt.s32.totalorder %v76, 2
    %v78 = vsel %vm77, %v73, %v74
    %v79 = vsel %vm77, %v72, %v73
    %v80 = vsel %vm77, %v71, %v72
    %v81 = vsel %vm77, %v74, %v71
    %83 = vset.pattern.permute.xlu0 0
    %84 = vperm.xlu0 %83, %v67
    %v85 = vpop.permute.xlu0 %84
    %88 = vset.pattern.permute.xlu0 0
    %89 = vperm.xlu0 %88, %v68
    %v90 = vpop.permute.xlu0 %89
    %93 = vset.pattern.permute.xlu0 0
    %94 = vperm.xlu0 %93, %v69
    %v95 = vpop.permute.xlu0 %94
    %98 = vset.pattern.permute.xlu0 0
    %99 = vperm.xlu0 %98, %v70
    %v100 = vpop.permute.xlu0 %99
    %v102 = vmul.f32 %v81, %v85
    %v103 = vmul.f32 %v80, %v90
    %v104 = vmul.f32 %v79, %v95
    %v105 = vmul.f32 %v78, %v100
    %v106 = vrot.slane %v39, 7
    %v107 = vrot.slane %v40, 7
    %v108 = vrot.slane %v41, 7
    %v109 = vrot.slane %v42, 7
    %vm110 = vcmp.lt.s32.totalorder %v76, 1
    %v111 = vsel %vm110, %v108, %v109
    %v112 = vsel %vm110, %v107, %v108
    %v113 = vsel %vm110, %v106, %v107
    %v114 = vsel %vm110, %v109, %v106
    %115 = vset.pattern.permute.xlu0 1
    %116 = vperm.xlu0 %115, %v67
    %v117 = vpop.permute.xlu0 %116
    %119 = vset.pattern.permute.xlu0 1
    %120 = vperm.xlu0 %119, %v68
    %v121 = vpop.permute.xlu0 %120
    %123 = vset.pattern.permute.xlu0 1
    %124 = vperm.xlu0 %123, %v69
    %v125 = vpop.permute.xlu0 %124
    %127 = vset.pattern.permute.xlu0 1
    %128 = vperm.xlu0 %127, %v70
    %v129 = vpop.permute.xlu0 %128
    %v131 = vmul.f32 %v114, %v117
    %v132 = vmul.f32 %v113, %v121
    %v133 = vmul.f32 %v112, %v125
    %v134 = vmul.f32 %v111, %v129
    %v135 = vrot.slane %v39, 1
    %v136 = vrot.slane %v40, 1
    %v137 = vrot.slane %v41, 1
    %v138 = vrot.slane %v42, 1
    %vm139 = vcmp.lt.s32.totalorder %v76, 7
    %v140 = vsel %vm139, %v137, %v138
    %v141 = vsel %vm139, %v136, %v137
    %v142 = vsel %vm139, %v135, %v136
    %v143 = vsel %vm139, %v138, %v135
    %144 = vset.pattern.permute.xlu0 2
    %145 = vperm.xlu0 %144, %v67
    %v146 = vpop.permute.xlu0 %145
    %148 = vset.pattern.permute.xlu0 2
    %149 = vperm.xlu0 %148, %v68
    %v150 = vpop.permute.xlu0 %149
    %152 = vset.pattern.permute.xlu0 2
    %153 = vperm.xlu0 %152, %v69
    %v154 = vpop.permute.xlu0 %153
    %156 = vset.pattern.permute.xlu0 2
    %157 = vperm.xlu0 %156, %v70
    %v158 = vpop.permute.xlu0 %157
    %v160 = vmul.f32 %v142, %v146
    %v161 = vmul.f32 %v141, %v150
    %v162 = vmul.f32 %v140, %v154
    %v163 = vmul.f32 %v143, %v158
    %v164 = vrot.slane %v39, 2
    %v165 = vrot.slane %v40, 2
    %v166 = vrot.slane %v41, 2
    %v167 = vrot.slane %v42, 2
    %vm168 = vcmp.lt.s32.totalorder %v76, 6
    %v169 = vsel %vm168, %v166, %v167
    %v170 = vsel %vm168, %v165, %v166
    %v171 = vsel %vm168, %v164, %v165
    %v172 = vsel %vm168, %v167, %v164
    %173 = vset.pattern.permute.xlu0 3
    %174 = vperm.xlu0 %173, %v67
    %v175 = vpop.permute.xlu0 %174
    %177 = vset.pattern.permute.xlu0 3
    %178 = vperm.xlu0 %177, %v68
    %v179 = vpop.permute.xlu0 %178
    %181 = vset.pattern.permute.xlu0 3
    %182 = vperm.xlu0 %181, %v69
    %v183 = vpop.permute.xlu0 %182
    %185 = vset.pattern.permute.xlu0 3
    %186 = vperm.xlu0 %185, %v70
    %v187 = vpop.permute.xlu0 %186
    %v189 = vmul.f32 %v171, %v175
    %v190 = vmul.f32 %v170, %v179
    %v191 = vmul.f32 %v169, %v183
    %v192 = vmul.f32 %v172, %v187
    %197 = vrot.lane.b32.xlu0 %v131, 8
    %v198 = vpop.permute.xlu0 %197
    %199 = vrot.lane.b32.xlu0 %v132, 8
    %v200 = vpop.permute.xlu0 %199
    %201 = vrot.lane.b32.xlu0 %v133, 8
    %v202 = vpop.permute.xlu0 %201
    %203 = vrot.lane.b32.xlu0 %v134, 8
    %v204 = vpop.permute.xlu0 %203
    %213 = vrot.lane.b32.xlu0 %v39, 16
    %v214 = vpop.permute.xlu0 %213
    %215 = vrot.lane.b32.xlu0 %v40, 16
    %v216 = vpop.permute.xlu0 %215
    %217 = vrot.lane.b32.xlu0 %v41, 16
    %v218 = vpop.permute.xlu0 %217
    %219 = vrot.lane.b32.xlu0 %v42, 16
    %v220 = vpop.permute.xlu0 %219
    %229 = vrot.lane.b32.xlu0 %v160, 24
    %v230 = vpop.permute.xlu0 %229
    %231 = vrot.lane.b32.xlu0 %v161, 24
    %v232 = vpop.permute.xlu0 %231
    %233 = vrot.lane.b32.xlu0 %v162, 24
    %v234 = vpop.permute.xlu0 %233
    %235 = vrot.lane.b32.xlu0 %v163, 24
    %v236 = vpop.permute.xlu0 %235
    %245 = vrot.lane.b32.xlu0 %v189, 32
    %v246 = vpop.permute.xlu0 %245
    %247 = vrot.lane.b32.xlu0 %v190, 32
    %v248 = vpop.permute.xlu0 %247
    %249 = vrot.lane.b32.xlu0 %v191, 32
    %v250 = vpop.permute.xlu0 %249
    %251 = vrot.lane.b32.xlu0 %v192, 32
    %v252 = vpop.permute.xlu0 %251
    %vm257 = vcmask 64512
    %v258 = vsel %vm257, %v102, %v198
    %v259 = vsel %vm257, %v103, %v200
    %v260 = vsel %vm257, %v104, %v202
    %v261 = vsel %vm257, %v105, %v204
    %vm262 = vcmask 130048
    %v263 = vsel %vm262, %v258, %v214
    %v264 = vsel %vm262, %v259, %v216
    %v265 = vsel %vm262, %v260, %v218
    %v266 = vsel %vm262, %v261, %v220
    %vm267 = vcmask 195584
    %v268 = vsel %vm267, %v263, %v230
    %v269 = vsel %vm267, %v264, %v232
    %v270 = vsel %vm267, %v265, %v234
    %v271 = vsel %vm267, %v266, %v236
    %vm272 = vcmask 261120
    %v273 = vsel %vm272, %v268, %v246
    %v274 = vsel %vm272, %v269, %v248
    %v275 = vsel %vm272, %v270, %v250
    %v276 = vsel %vm272, %v271, %v252
    %v277 = vld [vmem:[%s3] sm:$0xff]
    %v278 = vld [vmem:[%s3 + $0x8] sm:$0xff]
    %v279 = vld [vmem:[%s3 + $0x10] sm:$0xff]
    %v280 = vld [vmem:[%s3 + $0x18] sm:$0xff]
    %v281 = vld [vmem:[%s3 + $0x20] sm:$0xff]
    %v282 = vld [vmem:[%s4] sm:$0x1]
    %v284 = vlaneseq
    %v285 = vshrl.u32 %v284, 7
    %v286 = vsub.s32 0, %v285
    %v287 = vrot.slane %v282, %v286
    %vm289 = vcmask 326656
    %v291 = vsel %vm289, %v273, 0
    %v294 = vsel %vm289, %v274, 0
    %v297 = vsel %vm289, %v275, 0
    %v300 = vsel %vm289, %v276, 0
    %302 = vmatprep.subr.mxu0 0.0
    %303 = vmatpush1.msra.mxu0 %v277
    %304 = vmatprep.subr.mxu0 0.0
    %305 = vmatpush1.msra.mxu0 %v278
    %306 = vmatprep.subr.mxu0 0.0
    %307 = vmatpush1.msra.mxu0 %v279
    %308 = vmatprep.subr.mxu0 0.0
    %309 = vmatpush1.msra.mxu0 %v280
    %310 = vmatprep.subr.mxu0 0.0
    %311 = vmatpush1.msra.mxu0 %v281
    %312 = vmatprep.subr.mxu0 0.0
    %313 = vmatpush1.msra.mxu0 0.0
    %314 = vmatprep.subr.mxu0 0.0
    %315 = vmatpush1.msra.mxu0 0.0
    %316 = vmatprep.subr.mxu0 0.0
    %317 = vmatpush1.msra.mxu0 0.0
    %318 = vmatprep.subr.mxu0 0.0
    %319 = vmatpush1.msra.mxu0 0.0
    %320 = vmatprep.subr.mxu0 0.0
    %321 = vmatpush1.msra.mxu0 0.0
    %322 = vmatprep.subr.mxu0 0.0
    %323 = vmatpush1.msra.mxu0 0.0
    %324 = vmatprep.subr.mxu0 0.0
    %325 = vmatpush1.msra.mxu0 0.0
    %326 = vmatprep.subr.mxu0 0.0
    %327 = vmatpush1.msra.mxu0 0.0
    %328 = vmatprep.subr.mxu0 0.0
    %329 = vmatpush1.msra.mxu0 0.0
    %330 = vmatprep.subr.mxu0 0.0
    %331 = vmatpush1.msra.mxu0 0.0
    %332 = vmatprep.subr.mxu0 0.0
    %333 = vmatpush1.msra.mxu0 0.0
    %334 = vmatprep.subr.mxu0 0.0
    %335 = vmatpush1.msra.mxu0 0.0
    %336 = vmatprep.subr.mxu0 0.0
    %337 = vmatpush1.msra.mxu0 0.0
    %338 = vmatprep.subr.mxu0 0.0
    %339 = vmatpush1.msra.mxu0 0.0
    %340 = vmatprep.subr.mxu0 0.0
    %341 = vmatpush1.msra.mxu0 0.0
    %342 = vmatprep.subr.mxu0 0.0
    %343 = vmatpush1.msra.mxu0 0.0
    %344 = vmatprep.subr.mxu0 0.0
    %345 = vmatpush1.msra.mxu0 0.0
    %346 = vmatprep.subr.mxu0 0.0
    %347 = vmatpush1.msra.mxu0 0.0
    %348 = vmatprep.subr.mxu0 0.0
    %349 = vmatpush1.msra.mxu0 0.0
    %350 = vmatprep.subr.mxu0 0.0
    %351 = vmatpush1.msra.mxu0 0.0
    %352 = vmatprep.subr.mxu0 0.0
    %353 = vmatpush1.msra.mxu0 0.0
    %354 = vmatprep.subr.mxu0 0.0
    %355 = vmatpush1.msra.mxu0 0.0
    %356 = vmatprep.subr.mxu0 0.0
    %357 = vmatpush1.msra.mxu0 0.0
    %358 = vmatprep.subr.mxu0 0.0
    %359 = vmatpush1.msra.mxu0 0.0
    %360 = vmatprep.subr.mxu0 0.0
    %361 = vmatpush1.msra.mxu0 0.0
    %362 = vmatprep.subr.mxu0 0.0
    %363 = vmatpush1.msra.mxu0 0.0
    %364 = vmatprep.subr.mxu0 0.0
    %365 = vmatpush1.msra.mxu0 0.0
    %366 = vmatprep.mubr.f32.mxu0 0.0
    %367 = vmatmul.mubr.f32.gmra.mrb[0].mxu0 %v291
    %v368 = vpop.f32.mrb[0].mxu0
    %v369 = vadd.f32 %v287, %v368
    %v370 = vpop.f32.mrb[0].mxu0
    %371 = vmatprep.mubr.f32.mxu0 0.0
    %372 = vmatmul.mubr.f32.gmra.mrb[0].mxu0 %v294
    %v373 = vpop.f32.mrb[0].mxu0
    %v374 = vadd.f32 %v287, %v373
    %v375 = vpop.f32.mrb[0].mxu0
    %376 = vmatprep.mubr.f32.mxu0 0.0
    %377 = vmatmul.mubr.f32.gmra.mrb[0].mxu0 %v297
    %v378 = vpop.f32.mrb[0].mxu0
    %v379 = vadd.f32 %v287, %v378
    %v380 = vpop.f32.mrb[0].mxu0
    %381 = vmatprep.mubr.f32.mxu0 0.0
    %382 = vmatmul.mubr.f32.gmra.mrb[0].mxu0 %v300
    %v383 = vpop.f32.mrb[0].mxu0
    %v384 = vadd.f32 %v287, %v383
    %v385 = vpop.f32.mrb[0].mxu0
    %386 = vdwg.mxu0
    %v387 = vmul.f32 %v369, %v50
    %v388 = vmul.f32 %v374, %v55
    %v389 = vmul.f32 %v379, %v60
    %v390 = vmul.f32 %v384, %v65
    %v391 = vmax.f32 %v387, 0.0
    %v392 = vmax.f32 %v388, 0.0
    %v393 = vmax.f32 %v389, 0.0
    %v394 = vmax.f32 %v390, 0.0
    %v395 = vrot.slane %v391, 6
    %v396 = vrot.slane %v392, 6
    %v397 = vrot.slane %v393, 6
    %v398 = vrot.slane %v394, 6
    %v399 = vsel %vm77, %v397, %v398
    %v400 = vsel %vm77, %v396, %v397
    %v401 = vsel %vm77, %v395, %v396
    %v402 = vsel %vm77, %v398, %v395
    %v403 = vmul.f32 %v402, %v85
    %v404 = vmul.f32 %v401, %v90
    %v405 = vmul.f32 %v400, %v95
    %v406 = vmul.f32 %v399, %v100
    %v407 = vrot.slane %v391, 7
    %v408 = vrot.slane %v392, 7
    %v409 = vrot.slane %v393, 7
    %v410 = vrot.slane %v394, 7
    %v411 = vsel %vm110, %v409, %v410
    %v412 = vsel %vm110, %v408, %v409
    %v413 = vsel %vm110, %v407, %v408
    %v414 = vsel %vm110, %v410, %v407
    %v415 = vmul.f32 %v414, %v117
    %v416 = vmul.f32 %v413, %v121
    %v417 = vmul.f32 %v412, %v125
    %v418 = vmul.f32 %v411, %v129
    %v419 = vrot.slane %v391, 1
    %v420 = vrot.slane %v392, 1
    %v421 = vrot.slane %v393, 1
    %v422 = vrot.slane %v394, 1
    %v423 = vsel %vm139, %v421, %v422
    %v424 = vsel %vm139, %v420, %v421
    %v425 = vsel %vm139, %v419, %v420
    %v426 = vsel %vm139, %v422, %v419
    %v427 = vmul.f32 %v425, %v146
    %v428 = vmul.f32 %v424, %v150
    %v429 = vmul.f32 %v423, %v154
    %v430 = vmul.f32 %v426, %v158
    %v431 = vrot.slane %v391, 2
    %v432 = vrot.slane %v392, 2
    %v433 = vrot.slane %v393, 2
    %v434 = vrot.slane %v394, 2
    %v435 = vsel %vm168, %v433, %v434
    %v436 = vsel %vm168, %v432, %v433
    %v437 = vsel %vm168, %v431, %v432
    %v438 = vsel %vm168, %v434, %v431
    %v439 = vmul.f32 %v437, %v175
    %v440 = vmul.f32 %v436, %v179
    %v441 = vmul.f32 %v435, %v183
    %v442 = vmul.f32 %v438, %v187
    %447 = vrot.lane.b32.xlu0 %v415, 24
    %v448 = vpop.permute.xlu0 %447
    %449 = vrot.lane.b32.xlu0 %v416, 24
    %v450 = vpop.permute.xlu0 %449
    %451 = vrot.lane.b32.xlu0 %v417, 24
    %v452 = vpop.permute.xlu0 %451
    %453 = vrot.lane.b32.xlu0 %v418, 24
    %v454 = vpop.permute.xlu0 %453
    %463 = vrot.lane.b32.xlu0 %v391, 48
    %v464 = vpop.permute.xlu0 %463
    %465 = vrot.lane.b32.xlu0 %v392, 48
    %v466 = vpop.permute.xlu0 %465
    %467 = vrot.lane.b32.xlu0 %v393, 48
    %v468 = vpop.permute.xlu0 %467
    %469 = vrot.lane.b32.xlu0 %v394, 48
    %v470 = vpop.permute.xlu0 %469
    %479 = vrot.lane.b32.xlu0 %v427, 72
    %v480 = vpop.permute.xlu0 %479
    %481 = vrot.lane.b32.xlu0 %v428, 72
    %v482 = vpop.permute.xlu0 %481
    %483 = vrot.lane.b32.xlu0 %v429, 72
    %v484 = vpop.permute.xlu0 %483
    %485 = vrot.lane.b32.xlu0 %v430, 72
    %v486 = vpop.permute.xlu0 %485
    %495 = vrot.lane.b32.xlu0 %v439, 96
    %v496 = vpop.permute.xlu0 %495
    %497 = vrot.lane.b32.xlu0 %v440, 96
    %v498 = vpop.permute.xlu0 %497
    %499 = vrot.lane.b32.xlu0 %v441, 96
    %v500 = vpop.permute.xlu0 %499
    %501 = vrot.lane.b32.xlu0 %v442, 96
    %v502 = vpop.permute.xlu0 %501
    %v507 = vsel %vm267, %v403, %v448
    %v508 = vsel %vm267, %v404, %v450
    %v509 = vsel %vm267, %v405, %v452
    %v510 = vsel %vm267, %v406, %v454
    %vm511 = vcmask 392192
    %v512 = vsel %vm511, %v507, %v464
    %v513 = vsel %vm511, %v508, %v466
    %v514 = vsel %vm511, %v509, %v468
    %v515 = vsel %vm511, %v510, %v470
    %vm516 = vcmask 588800
    %v517 = vsel %vm516, %v512, %v480
    %v518 = vsel %vm516, %v513, %v482
    %v519 = vsel %vm516, %v514, %v484
    %v520 = vsel %vm516, %v515, %v486
    %vm521 = vcmask 785408
    %v522 = vsel %vm521, %v517, %v496
    %v523 = vsel %vm521, %v518, %v498
    %v524 = vsel %vm521, %v519, %v500
    %v525 = vsel %vm521, %v520, %v502
    %v526 = vld [vmem:[%s5] sm:$0xff]
    %v527 = vld [vmem:[%s5 + $0x8] sm:$0xff]
    %v528 = vld [vmem:[%s5 + $0x10] sm:$0xff]
    %v529 = vld [vmem:[%s5 + $0x18] sm:$0xff]
    %v530 = vld [vmem:[%s5 + $0x20] sm:$0xff]
    %v531 = vld [vmem:[%s5 + $0x28] sm:$0xff]
    %v532 = vld [vmem:[%s5 + $0x30] sm:$0xff]
    %v533 = vld [vmem:[%s5 + $0x38] sm:$0xff]
    %v534 = vld [vmem:[%s5 + $0x40] sm:$0xff]
    %v535 = vld [vmem:[%s5 + $0x48] sm:$0xff]
    %v536 = vld [vmem:[%s5 + $0x50] sm:$0xff]
    %v537 = vld [vmem:[%s5 + $0x58] sm:$0xff]
    %v538 = vld [vmem:[%s5 + $0x60] sm:$0xff]
    %v539 = vld [vmem:[%s5 + $0x68] sm:$0xff]
    %v540 = vld [vmem:[%s5 + $0x70] sm:$0xff]
    %v541 = vld [vmem:[%s6] sm:$0x1]
    %v543 = vlaneseq
    %v544 = vshrl.u32 %v543, 7
    %v545 = vsub.s32 0, %v544
    %v546 = vrot.slane %v541, %v545
    %vm548 = vcmask 982016
    %v550 = vsel %vm548, %v522, 0
    %v553 = vsel %vm548, %v523, 0
    %v556 = vsel %vm548, %v524, 0
    %v559 = vsel %vm548, %v525, 0
    %561 = vmatprep.subr.mxu0 0.0
    %562 = vmatpush1.msra.mxu0 %v526
    %563 = vmatprep.subr.mxu0 0.0
    %564 = vmatpush1.msra.mxu0 %v527
    %565 = vmatprep.subr.mxu0 0.0
    %566 = vmatpush1.msra.mxu0 %v528
    %567 = vmatprep.subr.mxu0 0.0
    %568 = vmatpush1.msra.mxu0 %v529
    %569 = vmatprep.subr.mxu0 0.0
    %570 = vmatpush1.msra.mxu0 %v530
    %571 = vmatprep.subr.mxu0 0.0
    %572 = vmatpush1.msra.mxu0 %v531
    %573 = vmatprep.subr.mxu0 0.0
    %574 = vmatpush1.msra.mxu0 %v532
    %575 = vmatprep.subr.mxu0 0.0
    %576 = vmatpush1.msra.mxu0 %v533
    %577 = vmatprep.subr.mxu0 0.0
    %578 = vmatpush1.msra.mxu0 %v534
    %579 = vmatprep.subr.mxu0 0.0
    %580 = vmatpush1.msra.mxu0 %v535
    %581 = vmatprep.subr.mxu0 0.0
    %582 = vmatpush1.msra.mxu0 %v536
    %583 = vmatprep.subr.mxu0 0.0
    %584 = vmatpush1.msra.mxu0 %v537
    %585 = vmatprep.subr.mxu0 0.0
    %586 = vmatpush1.msra.mxu0 %v538
    %587 = vmatprep.subr.mxu0 0.0
    %588 = vmatpush1.msra.mxu0 %v539
    %589 = vmatprep.subr.mxu0 0.0
    %590 = vmatpush1.msra.mxu0 %v540
    %591 = vmatprep.subr.mxu0 0.0
    %592 = vmatpush1.msra.mxu0 0.0
    %593 = vmatprep.subr.mxu0 0.0
    %594 = vmatpush1.msra.mxu0 0.0
    %595 = vmatprep.subr.mxu0 0.0
    %596 = vmatpush1.msra.mxu0 0.0
    %597 = vmatprep.subr.mxu0 0.0
    %598 = vmatpush1.msra.mxu0 0.0
    %599 = vmatprep.subr.mxu0 0.0
    %600 = vmatpush1.msra.mxu0 0.0
    %601 = vmatprep.subr.mxu0 0.0
    %602 = vmatpush1.msra.mxu0 0.0
    %603 = vmatprep.subr.mxu0 0.0
    %604 = vmatpush1.msra.mxu0 0.0
    %605 = vmatprep.subr.mxu0 0.0
    %606 = vmatpush1.msra.mxu0 0.0
    %607 = vmatprep.subr.mxu0 0.0
    %608 = vmatpush1.msra.mxu0 0.0
    %609 = vmatprep.subr.mxu0 0.0
    %610 = vmatpush1.msra.mxu0 0.0
    %611 = vmatprep.subr.mxu0 0.0
    %612 = vmatpush1.msra.mxu0 0.0
    %613 = vmatprep.subr.mxu0 0.0
    %614 = vmatpush1.msra.mxu0 0.0
    %615 = vmatprep.subr.mxu0 0.0
    %616 = vmatpush1.msra.mxu0 0.0
    %617 = vmatprep.subr.mxu0 0.0
    %618 = vmatpush1.msra.mxu0 0.0
    %619 = vmatprep.subr.mxu0 0.0
    %620 = vmatpush1.msra.mxu0 0.0
    %621 = vmatprep.subr.mxu0 0.0
    %622 = vmatpush1.msra.mxu0 0.0
    %623 = vmatprep.subr.mxu0 0.0
    %624 = vmatpush1.msra.mxu0 0.0
    %625 = vmatprep.mubr.f32.mxu0 0.0
    %626 = vmatmul.mubr.f32.gmra.mrb[0].mxu0 %v550
    %v627 = vpop.f32.mrb[0].mxu0
    %v628 = vadd.f32 %v546, %v627
    %v629 = vpop.f32.mrb[0].mxu0
    %630 = vmatprep.mubr.f32.mxu0 0.0
    %631 = vmatmul.mubr.f32.gmra.mrb[0].mxu0 %v553
    %v632 = vpop.f32.mrb[0].mxu0
    %v633 = vadd.f32 %v546, %v632
    %v634 = vpop.f32.mrb[0].mxu0
    %635 = vmatprep.mubr.f32.mxu0 0.0
    %636 = vmatmul.mubr.f32.gmra.mrb[0].mxu0 %v556
    %v637 = vpop.f32.mrb[0].mxu0
    %v638 = vadd.f32 %v546, %v637
    %v639 = vpop.f32.mrb[0].mxu0
    %640 = vmatprep.mubr.f32.mxu0 0.0
    %641 = vmatmul.mubr.f32.gmra.mrb[0].mxu0 %v559
    %v642 = vpop.f32.mrb[0].mxu0
    %v643 = vadd.f32 %v546, %v642
    %v644 = vpop.f32.mrb[0].mxu0
    %645 = vdwg.mxu0
    %v646 = vmul.f32 %v628, %v50
    %v647 = vmul.f32 %v633, %v55
    %v648 = vmul.f32 %v638, %v60
    %v649 = vmul.f32 %v643, %v65
    %v650 = vmax.f32 %v646, 0.0
    %v651 = vmax.f32 %v647, 0.0
    %v652 = vmax.f32 %v648, 0.0
    %v653 = vmax.f32 %v649, 0.0
    %v654 = vrot.slane %v650, 6
    %v655 = vrot.slane %v651, 6
    %v656 = vrot.slane %v652, 6
    %v657 = vrot.slane %v653, 6
    %v658 = vsel %vm77, %v656, %v657
    %v659 = vsel %vm77, %v655, %v656
    %v660 = vsel %vm77, %v654, %v655
    %v661 = vsel %vm77, %v657, %v654
    %v662 = vmul.f32 %v661, %v85
    %v663 = vmul.f32 %v660, %v90
    %v664 = vmul.f32 %v659, %v95
    %v665 = vmul.f32 %v658, %v100
    %v666 = vrot.slane %v650, 7
    %v667 = vrot.slane %v651, 7
    %v668 = vrot.slane %v652, 7
    %v669 = vrot.slane %v653, 7
    %v670 = vsel %vm110, %v668, %v669
    %v671 = vsel %vm110, %v667, %v668
    %v672 = vsel %vm110, %v666, %v667
    %v673 = vsel %vm110, %v669, %v666
    %v674 = vmul.f32 %v673, %v117
    %v675 = vmul.f32 %v672, %v121
    %v676 = vmul.f32 %v671, %v125
    %v677 = vmul.f32 %v670, %v129
    %v678 = vrot.slane %v650, 1
    %v679 = vrot.slane %v651, 1
    %v680 = vrot.slane %v652, 1
    %v681 = vrot.slane %v653, 1
    %v682 = vsel %vm139, %v680, %v681
    %v683 = vsel %vm139, %v679, %v680
    %v684 = vsel %vm139, %v678, %v679
    %v685 = vsel %vm139, %v681, %v678
    %v686 = vmul.f32 %v684, %v146
    %v687 = vmul.f32 %v683, %v150
    %v688 = vmul.f32 %v682, %v154
    %v689 = vmul.f32 %v685, %v158
    %v690 = vrot.slane %v650, 2
    %v691 = vrot.slane %v651, 2
    %v692 = vrot.slane %v652, 2
    %v693 = vrot.slane %v653, 2
    %v694 = vsel %vm168, %v692, %v693
    %v695 = vsel %vm168, %v691, %v692
    %v696 = vsel %vm168, %v690, %v691
    %v697 = vsel %vm168, %v693, %v690
    %v698 = vmul.f32 %v696, %v175
    %v699 = vmul.f32 %v695, %v179
    %v700 = vmul.f32 %v694, %v183
    %v701 = vmul.f32 %v697, %v187
    %706 = vrot.lane.b32.xlu0 %v662, 24
    %v707 = vpop.permute.xlu0 %706
    %708 = vrot.lane.b32.xlu0 %v663, 24
    %v709 = vpop.permute.xlu0 %708
    %710 = vrot.lane.b32.xlu0 %v664, 24
    %v711 = vpop.permute.xlu0 %710
    %712 = vrot.lane.b32.xlu0 %v665, 24
    %v713 = vpop.permute.xlu0 %712
    %718 = vrot.lane.b32.xlu0 %v415, 48
    %v719 = vpop.permute.xlu0 %718
    %720 = vrot.lane.b32.xlu0 %v416, 48
    %v721 = vpop.permute.xlu0 %720
    %722 = vrot.lane.b32.xlu0 %v417, 48
    %v723 = vpop.permute.xlu0 %722
    %724 = vrot.lane.b32.xlu0 %v418, 48
    %v725 = vpop.permute.xlu0 %724
    %734 = vrot.lane.b32.xlu0 %v674, 72
    %v735 = vpop.permute.xlu0 %734
    %736 = vrot.lane.b32.xlu0 %v675, 72
    %v737 = vpop.permute.xlu0 %736
    %738 = vrot.lane.b32.xlu0 %v676, 72
    %v739 = vpop.permute.xlu0 %738
    %740 = vrot.lane.b32.xlu0 %v677, 72
    %v741 = vpop.permute.xlu0 %740
    %746 = vrot.lane.b32.xlu0 %v391, 96
    %v747 = vpop.permute.xlu0 %746
    %748 = vrot.lane.b32.xlu0 %v392, 96
    %v749 = vpop.permute.xlu0 %748
    %750 = vrot.lane.b32.xlu0 %v393, 96
    %v751 = vpop.permute.xlu0 %750
    %752 = vrot.lane.b32.xlu0 %v394, 96
    %v753 = vpop.permute.xlu0 %752
    %762 = vrot.lane.b32.xlu0 %v650, 120
    %v763 = vpop.permute.xlu0 %762
    %764 = vrot.lane.b32.xlu0 %v651, 120
    %v765 = vpop.permute.xlu0 %764
    %766 = vrot.lane.b32.xlu0 %v652, 120
    %v767 = vpop.permute.xlu0 %766
    %768 = vrot.lane.b32.xlu0 %v653, 120
    %v769 = vpop.permute.xlu0 %768
    %774 = vrot.lane.b32.xlu0 %v427, 16
    %v775 = vpop.permute.xlu0 %774
    %776 = vrot.lane.b32.xlu0 %v428, 16
    %v777 = vpop.permute.xlu0 %776
    %778 = vrot.lane.b32.xlu0 %v429, 16
    %v779 = vpop.permute.xlu0 %778
    %780 = vrot.lane.b32.xlu0 %v430, 16
    %v781 = vpop.permute.xlu0 %780
    %790 = vrot.lane.b32.xlu0 %v686, 40
    %v791 = vpop.permute.xlu0 %790
    %792 = vrot.lane.b32.xlu0 %v687, 40
    %v793 = vpop.permute.xlu0 %792
    %794 = vrot.lane.b32.xlu0 %v688, 40
    %v795 = vpop.permute.xlu0 %794
    %796 = vrot.lane.b32.xlu0 %v689, 40
    %v797 = vpop.permute.xlu0 %796
    %802 = vrot.lane.b32.xlu0 %v439, 64
    %v803 = vpop.permute.xlu0 %802
    %804 = vrot.lane.b32.xlu0 %v440, 64
    %v805 = vpop.permute.xlu0 %804
    %806 = vrot.lane.b32.xlu0 %v441, 64
    %v807 = vpop.permute.xlu0 %806
    %808 = vrot.lane.b32.xlu0 %v442, 64
    %v809 = vpop.permute.xlu0 %808
    %818 = vrot.lane.b32.xlu0 %v698, 88
    %v819 = vpop.permute.xlu0 %818
    %820 = vrot.lane.b32.xlu0 %v699, 88
    %v821 = vpop.permute.xlu0 %820
    %822 = vrot.lane.b32.xlu0 %v700, 88
    %v823 = vpop.permute.xlu0 %822
    %824 = vrot.lane.b32.xlu0 %v701, 88
    %v825 = vpop.permute.xlu0 %824
    %v830 = vsel %vm267, %v403, %v707
    %v831 = vsel %vm267, %v404, %v709
    %v832 = vsel %vm267, %v405, %v711
    %v833 = vsel %vm267, %v406, %v713
    %v834 = vsel %vm511, %v830, %v719
    %v835 = vsel %vm511, %v831, %v721
    %v836 = vsel %vm511, %v832, %v723
    %v837 = vsel %vm511, %v833, %v725
    %v838 = vsel %vm516, %v834, %v735
    %v839 = vsel %vm516, %v835, %v737
    %v840 = vsel %vm516, %v836, %v739
    %v841 = vsel %vm516, %v837, %v741
    %v842 = vsel %vm521, %v838, %v747
    %v843 = vsel %vm521, %v839, %v749
    %v844 = vsel %vm521, %v840, %v751
    %v845 = vsel %vm521, %v841, %v753
    %v846 = vsel %vm548, %v842, %v763
    %v847 = vsel %vm548, %v843, %v765
    %v848 = vsel %vm548, %v844, %v767
    %v849 = vsel %vm548, %v845, %v769
    %v850 = vsel %vm262, %v763, %v775
    %v851 = vsel %vm262, %v765, %v777
    %v852 = vsel %vm262, %v767, %v779
    %v853 = vsel %vm262, %v769, %v781
    %v854 = vsel %vm289, %v850, %v791
    %v855 = vsel %vm289, %v851, %v793
    %v856 = vsel %vm289, %v852, %v795
    %v857 = vsel %vm289, %v853, %v797
    %vm858 = vcmask 523264
    %v859 = vsel %vm858, %v854, %v803
    %v860 = vsel %vm858, %v855, %v805
    %v861 = vsel %vm858, %v856, %v807
    %v862 = vsel %vm858, %v857, %v809
    %vm863 = vcmask 719872
    %v864 = vsel %vm863, %v859, %v819
    %v865 = vsel %vm863, %v860, %v821
    %v866 = vsel %vm863, %v861, %v823
    %v867 = vsel %vm863, %v862, %v825
    %v868 = vld [vmem:[%s7] sm:$0xff]
    %v869 = vld [vmem:[%s7 + $0x8] sm:$0xff]
    %v870 = vld [vmem:[%s7 + $0x10] sm:$0xff]
    %v871 = vld [vmem:[%s7 + $0x18] sm:$0xff]
    %v872 = vld [vmem:[%s7 + $0x20] sm:$0xff]
    %v873 = vld [vmem:[%s7 + $0x28] sm:$0xff]
    %v874 = vld [vmem:[%s7 + $0x30] sm:$0xff]
    %v875 = vld [vmem:[%s7 + $0x38] sm:$0xff]
    %v876 = vld [vmem:[%s7 + $0x40] sm:$0xff]
    %v877 = vld [vmem:[%s7 + $0x48] sm:$0xff]
    %v878 = vld [vmem:[%s7 + $0x50] sm:$0xff]
    %v879 = vld [vmem:[%s7 + $0x58] sm:$0xff]
    %v880 = vld [vmem:[%s7 + $0x60] sm:$0xff]
    %v881 = vld [vmem:[%s7 + $0x68] sm:$0xff]
    %v882 = vld [vmem:[%s7 + $0x70] sm:$0xff]
    %v883 = vld [vmem:[%s7 + $0x78] sm:$0xff]
    %v884 = vld [vmem:[%s7 + $0x80] sm:$0xff]
    %v885 = vld [vmem:[%s7 + $0x88] sm:$0xff]
    %v886 = vld [vmem:[%s7 + $0x90] sm:$0xff]
    %v887 = vld [vmem:[%s7 + $0x98] sm:$0xff]
    %v888 = vld [vmem:[%s7 + $0xa0] sm:$0xff]
    %v889 = vld [vmem:[%s7 + $0xa8] sm:$0xff]
    %v890 = vld [vmem:[%s7 + $0xb0] sm:$0xff]
    %v891 = vld [vmem:[%s7 + $0xb8] sm:$0xff]
    %v892 = vld [vmem:[%s7 + $0xc0] sm:$0xff]
    %v893 = vld [vmem:[%s7 + $0xc8] sm:$0xff]
    %v894 = vld [vmem:[%s7 + $0xd0] sm:$0xff]
    %v895 = vld [vmem:[%s7 + $0xd8] sm:$0xff]
    %v896 = vld [vmem:[%s7 + $0xe0] sm:$0xff]
    %v897 = vld [vmem:[%s7 + $0xe8] sm:$0xff]
    %v898 = vld [vmem:[%s8] sm:$0x1]
    %v900 = vlaneseq
    %v901 = vshrl.u32 %v900, 7
    %v902 = vsub.s32 0, %v901
    %v903 = vrot.slane %v898, %v902
    %vm905 = vcmask 916480
    %v907 = vsel %vm905, %v864, 0
    %v910 = vsel %vm905, %v865, 0
    %v913 = vsel %vm905, %v866, 0
    %v916 = vsel %vm905, %v867, 0
    %918 = vmatprep.subr.mxu0 0.0
    %919 = vmatpush1.msra.mxu0 %v868
    %920 = vmatprep.subr.mxu0 0.0
    %921 = vmatpush1.msra.mxu0 %v869
    %922 = vmatprep.subr.mxu0 0.0
    %923 = vmatpush1.msra.mxu0 %v870
    %924 = vmatprep.subr.mxu0 0.0
    %925 = vmatpush1.msra.mxu0 %v871
    %926 = vmatprep.subr.mxu0 0.0
    %927 = vmatpush1.msra.mxu0 %v872
    %928 = vmatprep.subr.mxu0 0.0
    %929 = vmatpush1.msra.mxu0 %v873
    %930 = vmatprep.subr.mxu0 0.0
    %931 = vmatpush1.msra.mxu0 %v874
    %932 = vmatprep.subr.mxu0 0.0
    %933 = vmatpush1.msra.mxu0 %v875
    %934 = vmatprep.subr.mxu0 0.0
    %935 = vmatpush1.msra.mxu0 %v876
    %936 = vmatprep.subr.mxu0 0.0
    %937 = vmatpush1.msra.mxu0 %v877
    %938 = vmatprep.subr.mxu0 0.0
    %939 = vmatpush1.msra.mxu0 %v878
    %940 = vmatprep.subr.mxu0 0.0
    %941 = vmatpush1.msra.mxu0 %v879
    %942 = vmatprep.subr.mxu0 0.0
    %943 = vmatpush1.msra.mxu0 %v880
    %944 = vmatprep.subr.mxu0 0.0
    %945 = vmatpush1.msra.mxu0 %v881
    %946 = vmatprep.subr.mxu0 0.0
    %947 = vmatpush1.msra.mxu0 %v882
    %948 = vmatprep.subr.mxu0 0.0
    %949 = vmatpush1.msra.mxu0 %v883
    %950 = vmatprep.subr.mxu0 0.0
    %951 = vmatpush1.msra.mxu0 %v884
    %952 = vmatprep.subr.mxu0 0.0
    %953 = vmatpush1.msra.mxu0 %v885
    %954 = vmatprep.subr.mxu0 0.0
    %955 = vmatpush1.msra.mxu0 %v886
    %956 = vmatprep.subr.mxu0 0.0
    %957 = vmatpush1.msra.mxu0 %v887
    %958 = vmatprep.subr.mxu0 0.0
    %959 = vmatpush1.msra.mxu0 %v888
    %960 = vmatprep.subr.mxu0 0.0
    %961 = vmatpush1.msra.mxu0 %v889
    %962 = vmatprep.subr.mxu0 0.0
    %963 = vmatpush1.msra.mxu0 %v890
    %964 = vmatprep.subr.mxu0 0.0
    %965 = vmatpush1.msra.mxu0 %v891
    %966 = vmatprep.subr.mxu0 0.0
    %967 = vmatpush1.msra.mxu0 %v892
    %968 = vmatprep.subr.mxu0 0.0
    %969 = vmatpush1.msra.mxu0 %v893
    %970 = vmatprep.subr.mxu0 0.0
    %971 = vmatpush1.msra.mxu0 %v894
    %972 = vmatprep.subr.mxu0 0.0
    %973 = vmatpush1.msra.mxu0 %v895
    %974 = vmatprep.subr.mxu0 0.0
    %975 = vmatpush1.msra.mxu0 %v896
    %976 = vmatprep.subr.mxu0 0.0
    %977 = vmatpush1.msra.mxu0 %v897
    %978 = vmatprep.subr.mxu0 0.0
    %979 = vmatpush1.msra.mxu0 0.0
    %980 = vmatprep.subr.mxu0 0.0
    %981 = vmatpush1.msra.mxu0 0.0
    %982 = vmatprep.mubr.f32.mxu0 %v907
    %983 = vmatmul.mubr.f32.gmra.mrb[0].mxu0 %v846
    %v984 = vpop.f32.mrb[0].mxu0
    %v985 = vadd.f32 %v903, %v984
    %v986 = vpop.f32.mrb[0].mxu0
    %987 = vmatprep.mubr.f32.mxu0 %v910
    %988 = vmatmul.mubr.f32.gmra.mrb[0].mxu0 %v847
    %v989 = vpop.f32.mrb[0].mxu0
    %v990 = vadd.f32 %v903, %v989
    %v991 = vpop.f32.mrb[0].mxu0
    %992 = vmatprep.mubr.f32.mxu0 %v913
    %993 = vmatmul.mubr.f32.gmra.mrb[0].mxu0 %v848
    %v994 = vpop.f32.mrb[0].mxu0
    %v995 = vadd.f32 %v903, %v994
    %v996 = vpop.f32.mrb[0].mxu0
    %997 = vmatprep.mubr.f32.mxu0 %v916
    %998 = vmatmul.mubr.f32.gmra.mrb[0].mxu0 %v849
    %v999 = vpop.f32.mrb[0].mxu0
    %v1000 = vadd.f32 %v903, %v999
    %v1001 = vpop.f32.mrb[0].mxu0
    %1002 = vdwg.mxu0
    %v1003 = vmul.f32 %v985, %v50
    %v1004 = vmul.f32 %v990, %v55
    %v1005 = vmul.f32 %v995, %v60
    %v1006 = vmul.f32 %v1000, %v65
    %v1007 = vmax.f32 %v1003, 0.0
    %v1008 = vmax.f32 %v1004, 0.0
    %v1009 = vmax.f32 %v1005, 0.0
    %v1010 = vmax.f32 %v1006, 0.0
    %1015 = vrot.lane.b32.xlu0 %v1007, 8
    %v1016 = vpop.permute.xlu0 %1015
    %1017 = vrot.lane.b32.xlu0 %v1008, 8
    %v1018 = vpop.permute.xlu0 %1017
    %1019 = vrot.lane.b32.xlu0 %v1009, 8
    %v1020 = vpop.permute.xlu0 %1019
    %1021 = vrot.lane.b32.xlu0 %v1010, 8
    %v1022 = vpop.permute.xlu0 %1021
    %v1027 = vsel %vm257, %v39, %v1016
    %v1028 = vsel %vm257, %v40, %v1018
    %v1029 = vsel %vm257, %v41, %v1020
    %v1030 = vsel %vm257, %v42, %v1022
    %v1031 = vld [vmem:[%s9] sm:$0xff]
    %v1032 = vld [vmem:[%s9 + $0x8] sm:$0xff]
    %v1033 = vld [vmem:[%s9 + $0x10] sm:$0xff]
    %v1034 = vld [vmem:[%s9 + $0x18] sm:$0xff]
    %v1035 = vld [vmem:[%s10] sm:$0x1]
    %v1037 = vlaneseq
    %v1038 = vshrl.u32 %v1037, 7
    %v1039 = vsub.s32 0, %v1038
    %v1040 = vrot.slane %v1035, %v1039
    %v1043 = vsel %vm272, %v1027, 0
    %v1046 = vsel %vm272, %v1028, 0
    %v1049 = vsel %vm272, %v1029, 0
    %v1052 = vsel %vm272, %v1030, 0
    %1054 = vmatprep.subr.mxu0 0.0
    %1055 = vmatpush1.msra.mxu0 %v1031
    %1056 = vmatprep.subr.mxu0 0.0
    %1057 = vmatpush1.msra.mxu0 %v1032
    %1058 = vmatprep.subr.mxu0 0.0
    %1059 = vmatpush1.msra.mxu0 %v1033
    %1060 = vmatprep.subr.mxu0 0.0
    %1061 = vmatpush1.msra.mxu0 %v1034
    %1062 = vmatprep.subr.mxu0 0.0
    %1063 = vmatpush1.msra.mxu0 0.0
    %1064 = vmatprep.subr.mxu0 0.0
    %1065 = vmatpush1.msra.mxu0 0.0
    %1066 = vmatprep.subr.mxu0 0.0
    %1067 = vmatpush1.msra.mxu0 0.0
    %1068 = vmatprep.subr.mxu0 0.0
    %1069 = vmatpush1.msra.mxu0 0.0
    %1070 = vmatprep.subr.mxu0 0.0
    %1071 = vmatpush1.msra.mxu0 0.0
    %1072 = vmatprep.subr.mxu0 0.0
    %1073 = vmatpush1.msra.mxu0 0.0
    %1074 = vmatprep.subr.mxu0 0.0
    %1075 = vmatpush1.msra.mxu0 0.0
    %1076 = vmatprep.subr.mxu0 0.0
    %1077 = vmatpush1.msra.mxu0 0.0
    %1078 = vmatprep.subr.mxu0 0.0
    %1079 = vmatpush1.msra.mxu0 0.0
    %1080 = vmatprep.subr.mxu0 0.0
    %1081 = vmatpush1.msra.mxu0 0.0
    %1082 = vmatprep.subr.mxu0 0.0
    %1083 = vmatpush1.msra.mxu0 0.0
    %1084 = vmatprep.subr.mxu0 0.0
    %1085 = vmatpush1.msra.mxu0 0.0
    %1086 = vmatprep.subr.mxu0 0.0
    %1087 = vmatpush1.msra.mxu0 0.0
    %1088 = vmatprep.subr.mxu0 0.0
    %1089 = vmatpush1.msra.mxu0 0.0
    %1090 = vmatprep.subr.mxu0 0.0
    %1091 = vmatpush1.msra.mxu0 0.0
    %1092 = vmatprep.subr.mxu0 0.0
    %1093 = vmatpush1.msra.mxu0 0.0
    %1094 = vmatprep.subr.mxu0 0.0
    %1095 = vmatpush1.msra.mxu0 0.0
    %1096 = vmatprep.subr.mxu0 0.0
    %1097 = vmatpush1.msra.mxu0 0.0
    %1098 = vmatprep.subr.mxu0 0.0
    %1099 = vmatpush1.msra.mxu0 0.0
    %1100 = vmatprep.subr.mxu0 0.0
    %1101 = vmatpush1.msra.mxu0 0.0
    %1102 = vmatprep.subr.mxu0 0.0
    %1103 = vmatpush1.msra.mxu0 0.0
    %1104 = vmatprep.subr.mxu0 0.0
    %1105 = vmatpush1.msra.mxu0 0.0
    %1106 = vmatprep.subr.mxu0 0.0
    %1107 = vmatpush1.msra.mxu0 0.0
    %1108 = vmatprep.subr.mxu0 0.0
    %1109 = vmatpush1.msra.mxu0 0.0
    %1110 = vmatprep.subr.mxu0 0.0
    %1111 = vmatpush1.msra.mxu0 0.0
    %1112 = vmatprep.subr.mxu0 0.0
    %1113 = vmatpush1.msra.mxu0 0.0
    %1114 = vmatprep.subr.mxu0 0.0
    %1115 = vmatpush1.msra.mxu0 0.0
    %1116 = vmatprep.subr.mxu0 0.0
    %1117 = vmatpush1.msra.mxu0 0.0
    %1118 = vmatprep.mubr.f32.mxu0 0.0
    %1119 = vmatmul.mubr.f32.gmra.mrb[0].mxu0 %v1043
    %v1120 = vpop.f32.mrb[0].mxu0
    %v1121 = vadd.f32 %v1040, %v1120
    %v1122 = vpop.f32.mrb[0].mxu0
    %1123 = vmatprep.mubr.f32.mxu0 0.0
    %1124 = vmatmul.mubr.f32.gmra.mrb[0].mxu0 %v1046
    %v1125 = vpop.f32.mrb[0].mxu0
    %v1126 = vadd.f32 %v1040, %v1125
    %v1127 = vpop.f32.mrb[0].mxu0
    %1128 = vmatprep.mubr.f32.mxu0 0.0
    %1129 = vmatmul.mubr.f32.gmra.mrb[0].mxu0 %v1049
    %v1130 = vpop.f32.mrb[0].mxu0
    %v1131 = vadd.f32 %v1040, %v1130
    %v1132 = vpop.f32.mrb[0].mxu0
    %1133 = vmatprep.mubr.f32.mxu0 0.0
    %1134 = vmatmul.mubr.f32.gmra.mrb[0].mxu0 %v1052
    %v1135 = vpop.f32.mrb[0].mxu0
    %v1136 = vadd.f32 %v1040, %v1135
    %v1137 = vpop.f32.mrb[0].mxu0
    %1138 = vdwg.mxu0
    %v1139 = vmul.f32 %v1121, %v50
    %v1140 = vmul.f32 %v1126, %v55
    %v1141 = vmul.f32 %v1131, %v60
    %v1142 = vmul.f32 %v1136, %v65
    %v1143 = vmax.f32 %v1139, 0.0
    %v1144 = vmax.f32 %v1140, 0.0
    %v1145 = vmax.f32 %v1141, 0.0
    %v1146 = vmax.f32 %v1142, 0.0
    %1147 = vst.msk [vmem:[#allocation2] sm:$0xff] %vm262, %v1143
    %1148 = vst.msk [vmem:[#allocation2 + $0x8] sm:$0xff] %vm262, %v1144
    %1149 = vst.msk [vmem:[#allocation2 + $0x10] sm:$0xff] %vm262, %v1145
    %1150 = vst.msk [vmem:[#allocation2 + $0x18] sm:$0xff] %vm262, %v1146
    // Predicated region
    $region46: #{densenet_forward.1} parent=1 // pred_check
      _
    $region47: #{densenet_forward.1} parent=1 // pred_check_branch
      %1152 = sbr.rel (0) target = $region49
    $region48: #{densenet_forward.1} parent=1 // pred_region
      %s1154 = ssub.s32 512, 512
      %1155 = vsyncadd [#allocation3], %s1154
      %s1156 = sshll.u32 [#allocation2], 4
      %s1157 = int_to_ptr.vmem [resolvable:$true] %s1156
      %1162 = dma.vmem_to_hbm [thread:$0]  %s1157, 512, %s11, [#allocation3], 128, 128, 8
    $region49: #{densenet_forward.1} parent=1 // pred_fallthru
      _
    // Predicated region
    $region50: #{densenet_forward.1} parent=1 // pred_check
      _
    $region51: #{densenet_forward.1} parent=1 // pred_check_branch
      %1164 = sbr.rel (0) target = $region53
    $region52: #{densenet_forward.1} parent=1 // pred_region
      %1165 = dma.done [#allocation3], 512
    $region53: #{densenet_forward.1} parent=1 // pred_fallthru
      _
    %1166 = vsyncpa [#allocation3], 1

</llo_original>
